<compile_context>
chip_gen: v7x
topology: tpu7x:2x2x1
jax: 0.10.0
libtpu: 0.0.40
codegen_flags: <defaults>
</compile_context>

<pallas_src>
import jax
import jax.numpy as jnp
from jax import lax
from jax.experimental import pallas as pl
from jax.experimental.pallas import tpu as pltpu

EPS = 1e-5                      # nn.BatchNorm2d default eps
VMEM_LIMIT = 32 * 1024 * 1024   # explicit scoped-VMEM limit (safe on v5e/v6e/v7x)
VMEM_BUDGET = 20 * 1024 * 1024  # tile-selection budget (headroom under the limit)
TM_MAX = 512


def _round_up(x, m):
    return (x + m - 1) // m * m


def _choose_tm(m, row_bytes, resident_bytes,
               budget=VMEM_BUDGET, tm_max=TM_MAX):
    """Largest sublane-aligned row tile whose double-buffered working set fits."""
    cap = max(8, _round_up(m, 8))
    if cap <= tm_max and resident_bytes + 2 * cap * row_bytes <= budget:
        return cap  # whole (rounded-up) problem in one tile
    for tm in (512, 256, 128, 64, 32, 16, 8):
        if tm <= cap and resident_bytes + 2 * tm * row_bytes <= budget:
            return tm
    return 8


# --------------------------------------------------------------------------
# Pallas kernels
# --------------------------------------------------------------------------
def _matmul_stats_kernel(a_ref, b_ref, y_ref, sum_ref, sq_ref):
    # (TM, K) @ (K, C) on the MXU, f32 accumulate.  Per-channel sum and
    # sum-of-squares are accumulated while the tile is still in VMEM
    # (reduction is VPU/XLU work that co-issues in slack under the MXU),
    # so the conv output is never re-read from HBM for the BN statistics.
    @pl.when(pl.program_id(0) == 0)
    def _():
        sum_ref[...] = jnp.zeros_like(sum_ref)
        sq_ref[...] = jnp.zeros_like(sq_ref)

    y = jnp.dot(a_ref[...], b_ref[...], preferred_element_type=jnp.float32)
    y_ref[...] = y
    sum_ref[...] += jnp.sum(y, axis=0, keepdims=True)
    sq_ref[...] += jnp.sum(y * y, axis=0, keepdims=True)


def _bn_relu_kernel(x_ref, s_ref, b_ref, o_ref):
    o_ref[...] = jnp.maximum(x_ref[...] * s_ref[...] + b_ref[...], 0.0)


def _dual_bn_add_relu_kernel(y_ref, r_ref, sy_ref, by_ref, sr_ref, br_ref, o_ref):
    # relu( BN2(conv2) + BN_d(downsample) ) fused in a single HBM pass.
    o_ref[...] = jnp.maximum(
        y_ref[...] * sy_ref[...] + by_ref[...]
        + r_ref[...] * sr_ref[...] + br_ref[...], 0.0)


# --------------------------------------------------------------------------
# pallas_call wrappers
# --------------------------------------------------------------------------
def conv2d_bn_stats(patches, w_mat):
    """y = patches @ w_mat  plus fused per-channel batch mean / biased variance."""
    M, K = patches.shape
    C = w_mat.shape[1]
    row_bytes = 4 * (K + C)                    # patch row + output row
    resident = 4 * K * C + 4 * 4 * C           # resident weight + sum/sq buffers
    tm = _choose_tm(M, row_bytes, resident)
    Mp = _round_up(M, tm)
    if Mp != M:
        # zero rows: with no conv bias they contribute 0 to sum / sum-of-squares
        patches = jnp.pad(patches, ((0, Mp - M), (0, 0)))
    nt = Mp // tm

    y, s, sq = pl.pallas_call(
        _matmul_stats_kernel,
        out_shape=(
            jax.ShapeDtypeStruct((Mp, C), jnp.float32),
            jax.ShapeDtypeStruct((1, C), jnp.float32),
            jax.ShapeDtypeStruct((1, C), jnp.float32),
        ),
        grid_spec=pltpu.PrefetchScalarGridSpec(
            num_scalar_prefetch=0,
            grid=(nt,),
            in_specs=[
                pl.BlockSpec((tm, K), lambda i: (i, 0)),
                pl.BlockSpec((K, C), lambda i: (0, 0)),
            ],
            out_specs=(
                pl.BlockSpec((tm, C), lambda i: (i, 0)),
                pl.BlockSpec((1, C), lambda i: (0, 0)),   # resident accumulator
                pl.BlockSpec((1, C), lambda i: (0, 0)),   # resident accumulator
            ),
        ),
        # grid axis carries the stats accumulators -> must be "arbitrary"
        compiler_params=pltpu.CompilerParams(
            dimension_semantics=("arbitrary",),
            vmem_limit_bytes=VMEM_LIMIT),
    )(patches, w_mat)

    mean = s / M
    var = jnp.maximum(sq / M - mean * mean, 0.0)   # clamp: cancellation safety
    return y[:M], mean, var


def _affine_call(kernel, row_args, vec_args):
    """Elementwise kernel over row-tiled (M, C) arrays + broadcast (1, C) vectors."""
    M, C = row_args[0].shape
    row_bytes = 4 * C * (len(row_args) + 1)          # inputs + output
    resident = 4 * C * len(vec_args) * 2
    tm = _choose_tm(M, row_bytes, resident)
    Mp = _round_up(M, tm)
    if Mp != M:
        row_args = [jnp.pad(a, ((0, Mp - M), (0, 0))) for a in row_args]
    nt = Mp // tm

    mat_spec = pl.BlockSpec((tm, C), lambda i: (i, 0))
    vec_spec = pl.BlockSpec((1, C), lambda i: (0, 0))
    out = pl.pallas_call(
        kernel,
        out_shape=jax.ShapeDtypeStruct((Mp, C), jnp.float32),
        grid_spec=pltpu.PrefetchScalarGridSpec(
            num_scalar_prefetch=0,
            grid=(nt,),
            in_specs=[mat_spec] * len(row_args) + [vec_spec] * len(vec_args),
            out_specs=mat_spec,
        ),
        compiler_params=pltpu.CompilerParams(
            dimension_semantics=("parallel",),
            vmem_limit_bytes=VMEM_LIMIT),
    )(*row_args, *vec_args)
    return out[:M]


def bn_relu(y, scale, shift):
    return _affine_call(_bn_relu_kernel, [y], [scale, shift])


def dual_bn_add_relu(y, res, sy, by, sr, br):
    return _affine_call(_dual_bn_add_relu_kernel, [y, res], [sy, by, sr, br])


# --------------------------------------------------------------------------
# glue: im2col, weight reshaping, BN scale/shift
# --------------------------------------------------------------------------
def im2col(x_nhwc, ksize, stride, pad):
    N, H, W, C = x_nhwc.shape
    Hout = (H + 2 * pad - ksize) // stride + 1
    Wout = (W + 2 * pad - ksize) // stride + 1
    xp = jnp.pad(x_nhwc, ((0, 0), (pad, pad), (pad, pad), (0, 0)))
    cols = []
    for di in range(ksize):
        for dj in range(ksize):
            cols.append(
                xp[:, di:di + (Hout - 1) * stride + 1:stride,
                      dj:dj + (Wout - 1) * stride + 1:stride, :]
            )
    patches = jnp.concatenate(cols, axis=-1)  # (N, Hout, Wout, k*k*C)
    return patches.reshape(N * Hout * Wout, ksize * ksize * C), Hout, Wout


def conv_weight_to_matrix(w_oihw):
    # (Cout, Cin, kh, kw) -> (kh*kw*Cin, Cout) matching im2col column ordering
    Cout = w_oihw.shape[0]
    return jnp.transpose(w_oihw, (2, 3, 1, 0)).reshape(-1, Cout)


def bn_scale_shift(gamma, beta, mean, var):
    inv = lax.rsqrt(var + EPS)
    scale = gamma.reshape(1, -1) * inv
    shift = beta.reshape(1, -1) - mean * scale
    return scale, shift


# --------------------------------------------------------------------------
# basic_block forward (Pallas)
# --------------------------------------------------------------------------
def basic_block_forward(x_nchw, params, stride):
    x = jnp.transpose(x_nchw, (0, 2, 3, 1)).astype(jnp.float32)  # NHWC
    N, H, W, Cin = x.shape
    Cout = params["w1"].shape[0]

    # conv1 (3x3, stride, pad 1, no bias) + fused BN stats -> bn1 -> relu
    p1, H1, W1 = im2col(x, 3, stride, 1)
    y1, m1, v1 = conv2d_bn_stats(p1, conv_weight_to_matrix(params["w1"]))
    s1, b1 = bn_scale_shift(params["g1"], params["b1"], m1, v1)
    a1 = bn_relu(y1, s1, b1)

    # conv2 (3x3, stride 1, pad 1, no bias) + fused BN stats
    p2, H2, W2 = im2col(a1.reshape(N, H1, W1, Cout), 3, 1, 1)
    y2, m2, v2 = conv2d_bn_stats(p2, conv_weight_to_matrix(params["w2"]))
    s2, b2 = bn_scale_shift(params["g2"], params["b2"], m2, v2)

    # downsample path
    if stride != 1 or Cin != Cout:
        pd, _, _ = im2col(x, 1, stride, 0)
        # conv bias `bd` dropped: a per-channel constant added before a
        # train-mode BatchNorm is exactly cancelled by the mean subtraction.
        yd, md, vd = conv2d_bn_stats(pd, conv_weight_to_matrix(params["wd"]))
        sd, bd = bn_scale_shift(params["gd"], params["betad"], md, vd)
        res = yd
    else:
        res = x.reshape(N * H * W, Cin)
        sd = jnp.ones((1, Cout), jnp.float32)
        bd = jnp.zeros((1, Cout), jnp.float32)

    # relu( bn2(conv2) + bn_d(downsample) )  -- both affines fused in one pass
    out = dual_bn_add_relu(y2, res, s2, b2, sd, bd)
    out = out.reshape(N, H2, W2, Cout)
    return jnp.transpose(out, (0, 3, 1, 2))  # back to NCHW


# --------------------------------------------------------------------------
# pure-JAX reference (for correctness check)
# --------------------------------------------------------------------------
def reference_forward(x, params, stride):
    Cin = x.shape[1]
    Cout = params["w1"].shape[0]

    def conv(x, w, stride, pad, bias=None):
        y = lax.conv_general_dilated(
            x, w, (stride, stride), [(pad, pad), (pad, pad)],
            dimension_numbers=("NCHW", "OIHW", "NCHW"))
        if bias is not None:
            y = y + bias.reshape(1, -1, 1, 1)
        return y

    def bn(x, g, b):
        mean = jnp.mean(x, axis=(0, 2, 3), keepdims=True)
        var = jnp.mean((x - mean) ** 2, axis=(0, 2, 3), keepdims=True)
        return (x - mean) / jnp.sqrt(var + EPS) * g.reshape(1, -1, 1, 1) \
            + b.reshape(1, -1, 1, 1)

    y = jax.nn.relu(bn(conv(x, params["w1"], stride, 1), params["g1"], params["b1"]))
    y = bn(conv(y, params["w2"], 1, 1), params["g2"], params["b2"])
    if stride != 1 or Cin != Cout:
        ds = bn(conv(x, params["wd"], stride, 0, params["bd"]),
                params["gd"], params["betad"])
    else:
        ds = x
    return jax.nn.relu(y + ds)


# --------------------------------------------------------------------------
if __name__ == "__main__":
    def make_params(cin, cout, key):
        ks = jax.random.split(key, 10)
        return {
            "w1": 0.1 * jax.random.normal(ks[0], (cout, cin, 3, 3), jnp.float32),
            "g1": 1.0 + 0.1 * jax.random.normal(ks[1], (cout,), jnp.float32),
            "b1": 0.1 * jax.random.normal(ks[2], (cout,), jnp.float32),
            "w2": 0.1 * jax.random.normal(ks[3], (cout, cout, 3, 3), jnp.float32),
            "g2": 1.0 + 0.1 * jax.random.normal(ks[4], (cout,), jnp.float32),
            "b2": 0.1 * jax.random.normal(ks[5], (cout,), jnp.float32),
            "wd": 0.1 * jax.random.normal(ks[6], (cout, cin, 1, 1), jnp.float32),
            "bd": 0.1 * jax.random.normal(ks[7], (cout,), jnp.float32),
            "gd": 1.0 + 0.1 * jax.random.normal(ks[8], (cout,), jnp.float32),
            "betad": 0.1 * jax.random.normal(ks[9], (cout,), jnp.float32),
        }

    # --- test 1: downsample path (stride != 1, Cin != Cout) ---------------
    N, Cin, H, W = 2, 4, 16, 16
    Cout, stride = 8, 2
    params = make_params(Cin, Cout, jax.random.PRNGKey(0))
    x = jax.random.normal(jax.random.PRNGKey(42), (N, Cin, H, W), jnp.float32)

    out = jax.block_until_ready(basic_block_forward(x, params, stride))
    ref = jax.block_until_ready(reference_forward(x, params, stride))
    assert out.shape == ref.shape == (N, Cout, H // stride, W // stride)
    assert jnp.allclose(out, ref, atol=1e-4, rtol=1e-4), (
        f"max err {float(jnp.max(jnp.abs(out - ref)))}")

    # --- test 2: identity path (stride == 1, Cin == Cout) ------------------
    params2 = make_params(8, 8, jax.random.PRNGKey(7))
    x2 = jax.random.normal(jax.random.PRNGKey(43), (2, 8, 16, 16), jnp.float32)

    out2 = jax.block_until_ready(basic_block_forward(x2, params2, 1))
    ref2 = jax.block_until_ready(reference_forward(x2, params2, 1))
    assert out2.shape == ref2.shape == (2, 8, 16, 16)
    assert jnp.allclose(out2, ref2, atol=1e-4, rtol=1e-4), (
        f"max err {float(jnp.max(jnp.abs(out2 - ref2)))}")

    print("KERNEL_OK")
</pallas_src>

<mosaic_0001>
module attributes {stable_mosaic.version = 11 : i64} {
  func.func @_matmul_stats_kernel(%arg0: i32, %arg1: memref<128x36xf32, #tpu.memory_space<vmem>>, %arg2: memref<36x8xf32, #tpu.memory_space<vmem>>, %arg3: memref<128x8xf32, #tpu.memory_space<vmem>>, %arg4: memref<1x8xf32, #tpu.memory_space<vmem>>, %arg5: memref<1x8xf32, #tpu.memory_space<vmem>>) attributes {dimension_semantics = [#tpu.dimension_semantics<arbitrary>], iteration_bounds = array<i64: 1>, scalar_prefetch = 0 : i64, scratch_operands = 0 : i64, tpu.core_type = #tpu.core_type<tc>, window_params = [{transform_indices = @transform_0, window_bounds = array<i64: 128, 36>}, {pipeline_mode = #tpu.pipeline_mode<synchronous>, transform_indices = @transform_1, window_bounds = array<i64: 36, 8>}, {transform_indices = @transform_2, window_bounds = array<i64: 128, 8>}, {pipeline_mode = #tpu.pipeline_mode<synchronous>, transform_indices = @transform_3, window_bounds = array<i64: 1, 8>}, {pipeline_mode = #tpu.pipeline_mode<synchronous>, transform_indices = @transform_4, window_bounds = array<i64: 1, 8>}]} {
    %c0_i32 = arith.constant 0 : i32
    %0 = arith.cmpi eq, %arg0, %c0_i32 : i32
    %1 = arith.extui %0 : i1 to i32
    %c0_i32_0 = arith.constant 0 : i32
    %2 = arith.cmpi ne, %1, %c0_i32_0 : i32
    scf.if %2 {
      %cst_16 = arith.constant 0.000000e+00 : f32
      %18 = vector.broadcast %cst_16 : f32 to vector<1x8xf32>
      %c0_17 = arith.constant 0 : index
      %c0_18 = arith.constant 0 : index
      %19 = vector.load %arg4[%c0_17, %c0_18] : memref<1x8xf32, #tpu.memory_space<vmem>>, vector<1x8xf32>
      tpu.vector_store %arg4[%c0_17, %c0_18], %18 {strides = array<i32>} : memref<1x8xf32, #tpu.memory_space<vmem>>, vector<1x8xf32>,
      %cst_19 = arith.constant 0.000000e+00 : f32
      %20 = vector.broadcast %cst_19 : f32 to vector<1x8xf32>
      %c0_20 = arith.constant 0 : index
      %c0_21 = arith.constant 0 : index
      %21 = vector.load %arg5[%c0_20, %c0_21] : memref<1x8xf32, #tpu.memory_space<vmem>>, vector<1x8xf32>
      tpu.vector_store %arg5[%c0_20, %c0_21], %20 {strides = array<i32>} : memref<1x8xf32, #tpu.memory_space<vmem>>, vector<1x8xf32>,
    } else {
    }
    %c0 = arith.constant 0 : index
    %c0_1 = arith.constant 0 : index
    %3 = vector.load %arg1[%c0, %c0_1] : memref<128x36xf32, #tpu.memory_space<vmem>>, vector<128x36xf32>
    %c0_2 = arith.constant 0 : index
    %c0_3 = arith.constant 0 : index
    %4 = vector.load %arg2[%c0_2, %c0_3] : memref<36x8xf32, #tpu.memory_space<vmem>>, vector<36x8xf32>
    %cst = arith.constant dense<0.000000e+00> : vector<128x8xf32>
    %5 = tpu.matmul %3, %4, %cst {dimension_numbers = #tpu.dot_dimension_numbers<[1], [0], [0], [1], [0, 0, 1, 1], [], []>} : vector<128x36xf32>, vector<36x8xf32>, vector<128x8xf32> -> vector<128x8xf32>
    %c0_4 = arith.constant 0 : index
    %c0_5 = arith.constant 0 : index
    %6 = vector.load %arg3[%c0_4, %c0_5] : memref<128x8xf32, #tpu.memory_space<vmem>>, vector<128x8xf32>
    tpu.vector_store %arg3[%c0_4, %c0_5], %5 {strides = array<i32>} : memref<128x8xf32, #tpu.memory_space<vmem>>, vector<128x8xf32>,
    %c0_6 = arith.constant 0 : index
    %c0_7 = arith.constant 0 : index
    %7 = vector.load %arg4[%c0_6, %c0_7] : memref<1x8xf32, #tpu.memory_space<vmem>>, vector<1x8xf32>
    %cst_8 = arith.constant dense<0.000000e+00> : vector<8xf32>
    %8 = vector.multi_reduction <add>, %5, %cst_8 [0] : vector<128x8xf32> to vector<8xf32>
    %9 = vector.shape_cast %8 : vector<8xf32> to vector<1x8xf32>
    %10 = arith.addf %7, %9 : vector<1x8xf32>
    %c0_9 = arith.constant 0 : index
    %c0_10 = arith.constant 0 : index
    %11 = vector.load %arg4[%c0_9, %c0_10] : memref<1x8xf32, #tpu.memory_space<vmem>>, vector<1x8xf32>
    tpu.vector_store %arg4[%c0_9, %c0_10], %10 {strides = array<i32>} : memref<1x8xf32, #tpu.memory_space<vmem>>, vector<1x8xf32>,
    %c0_11 = arith.constant 0 : index
    %c0_12 = arith.constant 0 : index
    %12 = vector.load %arg5[%c0_11, %c0_12] : memref<1x8xf32, #tpu.memory_space<vmem>>, vector<1x8xf32>
    %13 = arith.mulf %5, %5 : vector<128x8xf32>
    %cst_13 = arith.constant dense<0.000000e+00> : vector<8xf32>
    %14 = vector.multi_reduction <add>, %13, %cst_13 [0] : vector<128x8xf32> to vector<8xf32>
    %15 = vector.shape_cast %14 : vector<8xf32> to vector<1x8xf32>
    %16 = arith.addf %12, %15 : vector<1x8xf32>
    %c0_14 = arith.constant 0 : index
    %c0_15 = arith.constant 0 : index
    %17 = vector.load %arg5[%c0_14, %c0_15] : memref<1x8xf32, #tpu.memory_space<vmem>>, vector<1x8xf32>
    tpu.vector_store %arg5[%c0_14, %c0_15], %16 {strides = array<i32>} : memref<1x8xf32, #tpu.memory_space<vmem>>, vector<1x8xf32>,
    return
  }
  func.func @transform_0(%arg0: i32) -> (i32, i32) {
    %c0_i32 = arith.constant 0 : i32
    %c0_i32_0 = arith.constant 0 : i32
    return %arg0, %c0_i32 : i32, i32
  }
  func.func @transform_1(%arg0: i32) -> (i32, i32) {
    %c0_i32 = arith.constant 0 : i32
    %c0_i32_0 = arith.constant 0 : i32
    %c0_i32_1 = arith.constant 0 : i32
    return %c0_i32, %c0_i32_0 : i32, i32
  }
  func.func @transform_2(%arg0: i32) -> (i32, i32) {
    %c0_i32 = arith.constant 0 : i32
    %c0_i32_0 = arith.constant 0 : i32
    return %arg0, %c0_i32 : i32, i32
  }
  func.func @transform_3(%arg0: i32) -> (i32, i32) {
    %c0_i32 = arith.constant 0 : i32
    %c0_i32_0 = arith.constant 0 : i32
    %c0_i32_1 = arith.constant 0 : i32
    return %c0_i32, %c0_i32_0 : i32, i32
  }
  func.func @transform_4(%arg0: i32) -> (i32, i32) {
    %c0_i32 = arith.constant 0 : i32
    %c0_i32_0 = arith.constant 0 : i32
    %c0_i32_1 = arith.constant 0 : i32
    return %c0_i32, %c0_i32_0 : i32, i32
  }
}

</mosaic_0001>

<llo_original>
// kernel: tpu_custom_call.1
$region0: #{tpu_custom_call.1}
  #allocation0 [shape = 'u32[]', space=smem, size = 0x4, offset = 0x4, fixed_abs, tag = 'smem constant byte address 0x4 - core index']
  #allocation1 [shape = 'u32[144,128]{1,0:T(1,128)}', space=vmem, size = 0x12000, scoped, tag = 'internal scratch']
  %s0 = inlined_call_operand.vmem [shape: f32[128,36], index: 0, kind: input, shape index: {}]
  %s1 = inlined_call_operand.vmem [shape: f32[36,8], index: 1, kind: input, shape index: {}]
  %s2 = inlined_call_operand.vmem [shape: f32[128,8], index: 2, kind: output, shape index: {0}]
  %s3 = inlined_call_operand.hbm [shape: f32[1,8], index: 3, kind: output, shape index: {1}]
  %s4 = inlined_call_operand.hbm [shape: f32[1,8], index: 4, kind: output, shape index: {2}]
  %5 = xla_tuple %s2, %s3, %s4
  %s6 = sld [smem:[#allocation0]]
  $region38: #{tpu_custom_call.1} parent=0
    _
  %s8 = ssub.s32 1, %s6
  %s9 = scalar_select 0, %s8, %s6
  $region1: #{tpu_custom_call.1} parent=0
    #allocation2 [shape = 'u8[512]{0}', space=vmem, size = 0x400, scoped, tag = 'output window, operand 1, single buffered']
    #allocation3 [shape = 's32[1]{0}', space=sflag, size = 0x4, scoped, tag = 'scoped memory for tpu_custom_call.1']
    #allocation4 [shape = 'u8[512]{0}', space=vmem, size = 0x400, scoped, tag = 'output window, operand 2, single buffered']
    #allocation5 [shape = 's32[1]{0}', space=sflag, size = 0x4, scoped, tag = 'scoped memory for tpu_custom_call.1']
    %10 = vsyncpa [#allocation3], 0
    %11 = vsyncpa [#allocation5], 0
    // Predicated region
    $region2: #{tpu_custom_call.1} parent=1 // pred_check
      _
    $region3: #{tpu_custom_call.1} parent=1 // pred_check_branch
      %13 = sbr.rel (0) target = $region5
    $region4: #{tpu_custom_call.1} parent=1 // pred_region
      _
    $region5: #{tpu_custom_call.1} parent=1 // pred_fallthru
      _
    // Predicated region
    $region6: #{tpu_custom_call.1} parent=1 // pred_check
      _
    $region7: #{tpu_custom_call.1} parent=1 // pred_check_branch
      %15 = sbr.rel (0) target = $region9
    $region8: #{tpu_custom_call.1} parent=1 // pred_region
      _
    $region9: #{tpu_custom_call.1} parent=1 // pred_fallthru
      _
    %p16 = scmp.eq.s32.totalorder 0, 0
    // Predicated region
    $region10: #{tpu_custom_call.1} parent=1 // pred_check
      %p17 = pneg %p16
    $region11: #{tpu_custom_call.1} parent=1 // pred_check_branch
      %19 = sbr.rel (%p17) target = $region13
    $region12: #{tpu_custom_call.1} parent=1 // pred_region
      %vm20 = vcmask 57344
      %21 = vst.msk [vmem:[#allocation2] sm:$0x1] %vm20, 0.0
      %22 = vst.msk [vmem:[#allocation4] sm:$0x1] %vm20, 0.0
    $region13: #{tpu_custom_call.1} parent=1 // pred_fallthru
      _
    %v23 = vld [vmem:[%s0] sm:$0xff]
    %v24 = vld [vmem:[%s0 + $0x8] sm:$0xff]
    %v25 = vld [vmem:[%s0 + $0x10] sm:$0xff]
    %v26 = vld [vmem:[%s0 + $0x18] sm:$0xff]
    %v27 = vld [vmem:[%s0 + $0x20] sm:$0xff]
    %v28 = vld [vmem:[%s0 + $0x28] sm:$0xff]
    %v29 = vld [vmem:[%s0 + $0x30] sm:$0xff]
    %v30 = vld [vmem:[%s0 + $0x38] sm:$0xff]
    %v31 = vld [vmem:[%s0 + $0x40] sm:$0xff]
    %v32 = vld [vmem:[%s0 + $0x48] sm:$0xff]
    %v33 = vld [vmem:[%s0 + $0x50] sm:$0xff]
    %v34 = vld [vmem:[%s0 + $0x58] sm:$0xff]
    %v35 = vld [vmem:[%s0 + $0x60] sm:$0xff]
    %v36 = vld [vmem:[%s0 + $0x68] sm:$0xff]
    %v37 = vld [vmem:[%s0 + $0x70] sm:$0xff]
    %v38 = vld [vmem:[%s0 + $0x78] sm:$0xff]
    %v39 = vld [vmem:[%s1] sm:$0xff]
    %v40 = vld [vmem:[%s1 + $0x8] sm:$0xff]
    %v41 = vld [vmem:[%s1 + $0x10] sm:$0xff]
    %v42 = vld [vmem:[%s1 + $0x18] sm:$0xff]
    %v43 = vld [vmem:[%s1 + $0x20] sm:$0xf]
    %vm44 = vcmask 293888
    %v46 = vsel %vm44, %v23, 0
    %v49 = vsel %vm44, %v24, 0
    %v52 = vsel %vm44, %v25, 0
    %v55 = vsel %vm44, %v26, 0
    %v58 = vsel %vm44, %v27, 0
    %v61 = vsel %vm44, %v28, 0
    %v64 = vsel %vm44, %v29, 0
    %v67 = vsel %vm44, %v30, 0
    %v70 = vsel %vm44, %v31, 0
    %v73 = vsel %vm44, %v32, 0
    %v76 = vsel %vm44, %v33, 0
    %v79 = vsel %vm44, %v34, 0
    %v82 = vsel %vm44, %v35, 0
    %v85 = vsel %vm44, %v36, 0
    %v88 = vsel %vm44, %v37, 0
    %v91 = vsel %vm44, %v38, 0
    %vm93 = vcmask 1043456
    %v95 = vsel %vm93, %v43, 0
    %97 = vmatprep.subr.mxu0 0.0
    %98 = vmatpush1.msra.mxu0 %v39
    %99 = vmatprep.subr.mxu0 0.0
    %100 = vmatpush1.msra.mxu0 %v40
    %101 = vmatprep.subr.mxu0 0.0
    %102 = vmatpush1.msra.mxu0 %v41
    %103 = vmatprep.subr.mxu0 0.0
    %104 = vmatpush1.msra.mxu0 %v42
    %105 = vmatprep.subr.mxu0 0.0
    %106 = vmatpush1.msra.mxu0 %v95
    %107 = vmatprep.subr.mxu0 0.0
    %108 = vmatpush1.msra.mxu0 0.0
    %109 = vmatprep.subr.mxu0 0.0
    %110 = vmatpush1.msra.mxu0 0.0
    %111 = vmatprep.subr.mxu0 0.0
    %112 = vmatpush1.msra.mxu0 0.0
    %113 = vmatprep.subr.mxu0 0.0
    %114 = vmatpush1.msra.mxu0 0.0
    %115 = vmatprep.subr.mxu0 0.0
    %116 = vmatpush1.msra.mxu0 0.0
    %117 = vmatprep.subr.mxu0 0.0
    %118 = vmatpush1.msra.mxu0 0.0
    %119 = vmatprep.subr.mxu0 0.0
    %120 = vmatpush1.msra.mxu0 0.0
    %121 = vmatprep.subr.mxu0 0.0
    %122 = vmatpush1.msra.mxu0 0.0
    %123 = vmatprep.subr.mxu0 0.0
    %124 = vmatpush1.msra.mxu0 0.0
    %125 = vmatprep.subr.mxu0 0.0
    %126 = vmatpush1.msra.mxu0 0.0
    %127 = vmatprep.subr.mxu0 0.0
    %128 = vmatpush1.msra.mxu0 0.0
    %129 = vmatprep.subr.mxu0 0.0
    %130 = vmatpush1.msra.mxu0 0.0
    %131 = vmatprep.subr.mxu0 0.0
    %132 = vmatpush1.msra.mxu0 0.0
    %133 = vmatprep.subr.mxu0 0.0
    %134 = vmatpush1.msra.mxu0 0.0
    %135 = vmatprep.subr.mxu0 0.0
    %136 = vmatpush1.msra.mxu0 0.0
    %137 = vmatprep.subr.mxu0 0.0
    %138 = vmatpush1.msra.mxu0 0.0
    %139 = vmatprep.subr.mxu0 0.0
    %140 = vmatpush1.msra.mxu0 0.0
    %141 = vmatprep.subr.mxu0 0.0
    %142 = vmatpush1.msra.mxu0 0.0
    %143 = vmatprep.subr.mxu0 0.0
    %144 = vmatpush1.msra.mxu0 0.0
    %145 = vmatprep.subr.mxu0 0.0
    %146 = vmatpush1.msra.mxu0 0.0
    %147 = vmatprep.subr.mxu0 0.0
    %148 = vmatpush1.msra.mxu0 0.0
    %149 = vmatprep.subr.mxu0 0.0
    %150 = vmatpush1.msra.mxu0 0.0
    %151 = vmatprep.subr.mxu0 0.0
    %152 = vmatpush1.msra.mxu0 0.0
    %153 = vmatprep.subr.mxu0 0.0
    %154 = vmatpush1.msra.mxu0 0.0
    %155 = vmatprep.subr.mxu0 0.0
    %156 = vmatpush1.msra.mxu0 0.0
    %157 = vmatprep.subr.mxu0 0.0
    %158 = vmatpush1.msra.mxu0 0.0
    %159 = vmatprep.subr.mxu0 0.0
    %160 = vmatpush1.msra.mxu0 0.0
    %161 = vmatprep.mubr.f32.mxu0 0.0
    %162 = vmatmul.mubr.f32.gmra.mrb[0].mxu0 %v46
    %v163 = vpop.f32.mrb[0].mxu0
    %v164 = vadd.f32 0.0, %v163
    %v165 = vpop.f32.mrb[0].mxu0
    %166 = vmatprep.mubr.f32.mxu0 0.0
    %167 = vmatmul.mubr.f32.gmra.mrb[0].mxu0 %v49
    %v168 = vpop.f32.mrb[0].mxu0
    %v169 = vadd.f32 0.0, %v168
    %v170 = vpop.f32.mrb[0].mxu0
    %171 = vmatprep.mubr.f32.mxu0 0.0
    %172 = vmatmul.mubr.f32.gmra.mrb[0].mxu0 %v52
    %v173 = vpop.f32.mrb[0].mxu0
    %v174 = vadd.f32 0.0, %v173
    %v175 = vpop.f32.mrb[0].mxu0
    %176 = vmatprep.mubr.f32.mxu0 0.0
    %177 = vmatmul.mubr.f32.gmra.mrb[0].mxu0 %v55
    %v178 = vpop.f32.mrb[0].mxu0
    %v179 = vadd.f32 0.0, %v178
    %v180 = vpop.f32.mrb[0].mxu0
    %181 = vmatprep.mubr.f32.mxu0 0.0
    %182 = vmatmul.mubr.f32.gmra.mrb[0].mxu0 %v58
    %v183 = vpop.f32.mrb[0].mxu0
    %v184 = vadd.f32 0.0, %v183
    %v185 = vpop.f32.mrb[0].mxu0
    %186 = vmatprep.mubr.f32.mxu0 0.0
    %187 = vmatmul.mubr.f32.gmra.mrb[0].mxu0 %v61
    %v188 = vpop.f32.mrb[0].mxu0
    %v189 = vadd.f32 0.0, %v188
    %v190 = vpop.f32.mrb[0].mxu0
    %191 = vmatprep.mubr.f32.mxu0 0.0
    %192 = vmatmul.mubr.f32.gmra.mrb[0].mxu0 %v64
    %v193 = vpop.f32.mrb[0].mxu0
    %v194 = vadd.f32 0.0, %v193
    %v195 = vpop.f32.mrb[0].mxu0
    %196 = vmatprep.mubr.f32.mxu0 0.0
    %197 = vmatmul.mubr.f32.gmra.mrb[0].mxu0 %v67
    %v198 = vpop.f32.mrb[0].mxu0
    %v199 = vadd.f32 0.0, %v198
    %v200 = vpop.f32.mrb[0].mxu0
    %201 = vmatprep.mubr.f32.mxu0 0.0
    %202 = vmatmul.mubr.f32.gmra.mrb[0].mxu0 %v70
    %v203 = vpop.f32.mrb[0].mxu0
    %v204 = vadd.f32 0.0, %v203
    %v205 = vpop.f32.mrb[0].mxu0
    %206 = vmatprep.mubr.f32.mxu0 0.0
    %207 = vmatmul.mubr.f32.gmra.mrb[0].mxu0 %v73
    %v208 = vpop.f32.mrb[0].mxu0
    %v209 = vadd.f32 0.0, %v208
    %v210 = vpop.f32.mrb[0].mxu0
    %211 = vmatprep.mubr.f32.mxu0 0.0
    %212 = vmatmul.mubr.f32.gmra.mrb[0].mxu0 %v76
    %v213 = vpop.f32.mrb[0].mxu0
    %v214 = vadd.f32 0.0, %v213
    %v215 = vpop.f32.mrb[0].mxu0
    %216 = vmatprep.mubr.f32.mxu0 0.0
    %217 = vmatmul.mubr.f32.gmra.mrb[0].mxu0 %v79
    %v218 = vpop.f32.mrb[0].mxu0
    %v219 = vadd.f32 0.0, %v218
    %v220 = vpop.f32.mrb[0].mxu0
    %221 = vmatprep.mubr.f32.mxu0 0.0
    %222 = vmatmul.mubr.f32.gmra.mrb[0].mxu0 %v82
    %v223 = vpop.f32.mrb[0].mxu0
    %v224 = vadd.f32 0.0, %v223
    %v225 = vpop.f32.mrb[0].mxu0
    %226 = vmatprep.mubr.f32.mxu0 0.0
    %227 = vmatmul.mubr.f32.gmra.mrb[0].mxu0 %v85
    %v228 = vpop.f32.mrb[0].mxu0
    %v229 = vadd.f32 0.0, %v228
    %v230 = vpop.f32.mrb[0].mxu0
    %231 = vmatprep.mubr.f32.mxu0 0.0
    %232 = vmatmul.mubr.f32.gmra.mrb[0].mxu0 %v88
    %v233 = vpop.f32.mrb[0].mxu0
    %v234 = vadd.f32 0.0, %v233
    %v235 = vpop.f32.mrb[0].mxu0
    %236 = vmatprep.mubr.f32.mxu0 0.0
    %237 = vmatmul.mubr.f32.gmra.mrb[0].mxu0 %v91
    %v238 = vpop.f32.mrb[0].mxu0
    %v239 = vadd.f32 0.0, %v238
    %v240 = vpop.f32.mrb[0].mxu0
    %241 = vdwg.mxu0
    %vm242 = vcmask 64512
    %243 = vst.msk [vmem:[%s2] sm:$0xff] %vm242, %v164
    %244 = vst.msk [vmem:[%s2 + $0x8] sm:$0xff] %vm242, %v169
    %245 = vst.msk [vmem:[%s2 + $0x10] sm:$0xff] %vm242, %v174
    %246 = vst.msk [vmem:[%s2 + $0x18] sm:$0xff] %vm242, %v179
    %247 = vst.msk [vmem:[%s2 + $0x20] sm:$0xff] %vm242, %v184
    %248 = vst.msk [vmem:[%s2 + $0x28] sm:$0xff] %vm242, %v189
    %249 = vst.msk [vmem:[%s2 + $0x30] sm:$0xff] %vm242, %v194
    %250 = vst.msk [vmem:[%s2 + $0x38] sm:$0xff] %vm242, %v199
    %251 = vst.msk [vmem:[%s2 + $0x40] sm:$0xff] %vm242, %v204
    %252 = vst.msk [vmem:[%s2 + $0x48] sm:$0xff] %vm242, %v209
    %253 = vst.msk [vmem:[%s2 + $0x50] sm:$0xff] %vm242, %v214
    %254 = vst.msk [vmem:[%s2 + $0x58] sm:$0xff] %vm242, %v219
    %255 = vst.msk [vmem:[%s2 + $0x60] sm:$0xff] %vm242, %v224
    %256 = vst.msk [vmem:[%s2 + $0x68] sm:$0xff] %vm242, %v229
    %257 = vst.msk [vmem:[%s2 + $0x70] sm:$0xff] %vm242, %v234
    %258 = vst.msk [vmem:[%s2 + $0x78] sm:$0xff] %vm242, %v239
    %v259 = vld [vmem:[#allocation2] sm:$0x1]
    %v260 = vsel %vm242, %v164, 0.0
    %v261 = vsel %vm242, %v169, 0.0
    %v262 = vadd.f32 %v260, %v261
    %v263 = vsel %vm242, %v174, 0.0
    %v264 = vadd.f32 %v262, %v263
    %v265 = vsel %vm242, %v179, 0.0
    %v266 = vadd.f32 %v264, %v265
    %v267 = vsel %vm242, %v184, 0.0
    %v268 = vadd.f32 %v266, %v267
    %v269 = vsel %vm242, %v189, 0.0
    %v270 = vadd.f32 %v268, %v269
    %v271 = vsel %vm242, %v194, 0.0
    %v272 = vadd.f32 %v270, %v271
    %v273 = vsel %vm242, %v199, 0.0
    %v274 = vadd.f32 %v272, %v273
    %v275 = vsel %vm242, %v204, 0.0
    %v276 = vadd.f32 %v274, %v275
    %v277 = vsel %vm242, %v209, 0.0
    %v278 = vadd.f32 %v276, %v277
    %v279 = vsel %vm242, %v214, 0.0
    %v280 = vadd.f32 %v278, %v279
    %v281 = vsel %vm242, %v219, 0.0
    %v282 = vadd.f32 %v280, %v281
    %v283 = vsel %vm242, %v224, 0.0
    %v284 = vadd.f32 %v282, %v283
    %v285 = vsel %vm242, %v229, 0.0
    %v286 = vadd.f32 %v284, %v285
    %v287 = vsel %vm242, %v234, 0.0
    %v288 = vadd.f32 %v286, %v287
    %v289 = vsel %vm242, %v239, 0.0
    %v290 = vadd.f32 %v288, %v289
    %v291 = vrot.slane %v290, 4
    %v292 = vadd.f32 %v290, %v291
    %v293 = vrot.slane %v292, 2
    %v294 = vadd.f32 %v292, %v293
    %v295 = vrot.slane %v294, 1
    %v296 = vadd.f32 %v294, %v295
    %v297 = vadd.f32 %v259, %v296
    %vm298 = vcmask 57344
    %299 = vst.msk [vmem:[#allocation2] sm:$0x1] %vm298, %v297
    %v300 = vld [vmem:[#allocation4] sm:$0x1]
    %v301 = vmul.f32 %v164, %v164
    %v302 = vmul.f32 %v169, %v169
    %v303 = vmul.f32 %v174, %v174
    %v304 = vmul.f32 %v179, %v179
    %v305 = vmul.f32 %v184, %v184
    %v306 = vmul.f32 %v189, %v189
    %v307 = vmul.f32 %v194, %v194
    %v308 = vmul.f32 %v199, %v199
    %v309 = vmul.f32 %v204, %v204
    %v310 = vmul.f32 %v209, %v209
    %v311 = vmul.f32 %v214, %v214
    %v312 = vmul.f32 %v219, %v219
    %v313 = vmul.f32 %v224, %v224
    %v314 = vmul.f32 %v229, %v229
    %v315 = vmul.f32 %v234, %v234
    %v316 = vmul.f32 %v239, %v239
    %v317 = vsel %vm242, %v301, 0.0
    %v318 = vsel %vm242, %v302, 0.0
    %v319 = vadd.f32 %v317, %v318
    %v320 = vsel %vm242, %v303, 0.0
    %v321 = vadd.f32 %v319, %v320
    %v322 = vsel %vm242, %v304, 0.0
    %v323 = vadd.f32 %v321, %v322
    %v324 = vsel %vm242, %v305, 0.0
    %v325 = vadd.f32 %v323, %v324
    %v326 = vsel %vm242, %v306, 0.0
    %v327 = vadd.f32 %v325, %v326
    %v328 = vsel %vm242, %v307, 0.0
    %v329 = vadd.f32 %v327, %v328
    %v330 = vsel %vm242, %v308, 0.0
    %v331 = vadd.f32 %v329, %v330
    %v332 = vsel %vm242, %v309, 0.0
    %v333 = vadd.f32 %v331, %v332
    %v334 = vsel %vm242, %v310, 0.0
    %v335 = vadd.f32 %v333, %v334
    %v336 = vsel %vm242, %v311, 0.0
    %v337 = vadd.f32 %v335, %v336
    %v338 = vsel %vm242, %v312, 0.0
    %v339 = vadd.f32 %v337, %v338
    %v340 = vsel %vm242, %v313, 0.0
    %v341 = vadd.f32 %v339, %v340
    %v342 = vsel %vm242, %v314, 0.0
    %v343 = vadd.f32 %v341, %v342
    %v344 = vsel %vm242, %v315, 0.0
    %v345 = vadd.f32 %v343, %v344
    %v346 = vsel %vm242, %v316, 0.0
    %v347 = vadd.f32 %v345, %v346
    %v348 = vrot.slane %v347, 4
    %v349 = vadd.f32 %v347, %v348
    %v350 = vrot.slane %v349, 2
    %v351 = vadd.f32 %v349, %v350
    %v352 = vrot.slane %v351, 1
    %v353 = vadd.f32 %v351, %v352
    %v354 = vadd.f32 %v300, %v353
    %355 = vst.msk [vmem:[#allocation4] sm:$0x1] %vm298, %v354
    // Predicated region
    $region14: #{tpu_custom_call.1} parent=1 // pred_check
      _
    $region15: #{tpu_custom_call.1} parent=1 // pred_check_branch
      %357 = sbr.rel (0) target = $region17
    $region16: #{tpu_custom_call.1} parent=1 // pred_region
      _
    $region17: #{tpu_custom_call.1} parent=1 // pred_fallthru
      _
    // Predicated region
    $region18: #{tpu_custom_call.1} parent=1 // pred_check
      _
    $region19: #{tpu_custom_call.1} parent=1 // pred_check_branch
      %359 = sbr.rel (0) target = $region21
    $region20: #{tpu_custom_call.1} parent=1 // pred_region
      %s361 = ssub.s32 16, 16
      %362 = vsyncadd [#allocation3], %s361
      %s364 = sshll.u32 [#allocation2], 4
      %s365 = int_to_ptr.vmem [resolvable:$true] %s364
      %367 = dma.vmem_to_hbm [thread:$0]  %s365, 16, %s3, [#allocation3]
    $region21: #{tpu_custom_call.1} parent=1 // pred_fallthru
      _
    // Predicated region
    $region22: #{tpu_custom_call.1} parent=1 // pred_check
      _
    $region23: #{tpu_custom_call.1} parent=1 // pred_check_branch
      %369 = sbr.rel (0) target = $region25
    $region24: #{tpu_custom_call.1} parent=1 // pred_region
      %s371 = ssub.s32 16, 16
      %372 = vsyncadd [#allocation5], %s371
      %s374 = sshll.u32 [#allocation4], 4
      %s375 = int_to_ptr.vmem [resolvable:$true] %s374
      %377 = dma.vmem_to_hbm [thread:$0]  %s375, 16, %s4, [#allocation5]
    $region25: #{tpu_custom_call.1} parent=1 // pred_fallthru
      _
    // Predicated region
    $region26: #{tpu_custom_call.1} parent=1 // pred_check
      _
    $region27: #{tpu_custom_call.1} parent=1 // pred_check_branch
      %379 = sbr.rel (0) target = $region29
    $region28: #{tpu_custom_call.1} parent=1 // pred_region
      _
    $region29: #{tpu_custom_call.1} parent=1 // pred_fallthru
      _
    // Predicated region
    $region30: #{tpu_custom_call.1} parent=1 // pred_check
      _
    $region31: #{tpu_custom_call.1} parent=1 // pred_check_branch
      %381 = sbr.rel (0) target = $region33
    $region32: #{tpu_custom_call.1} parent=1 // pred_region
      %382 = dma.done [#allocation3], 16
    $region33: #{tpu_custom_call.1} parent=1 // pred_fallthru
      _
    // Predicated region
    $region34: #{tpu_custom_call.1} parent=1 // pred_check
      _
    $region35: #{tpu_custom_call.1} parent=1 // pred_check_branch
      %384 = sbr.rel (0) target = $region37
    $region36: #{tpu_custom_call.1} parent=1 // pred_region
      %385 = dma.done [#allocation5], 16
    $region37: #{tpu_custom_call.1} parent=1 // pred_fallthru
      _
    %386 = vsyncpa [#allocation3], 1
    %387 = vsyncpa [#allocation5], 1

</llo_original>
